<compile_context>
chip_gen: v7x
topology: tpu7x:2x2x1
jax: 0.10.0
libtpu: 0.0.40
codegen_flags: <defaults>
</compile_context>

<pallas_src>
import functools

import jax
import jax.numpy as jnp
from jax.experimental import pallas as pl
from jax.experimental.pallas import tpu as pltpu


def _actor_kernel(*refs, is_training, inv_temperature):
    if is_training:
        s_ref, w_ref, b_ref, embt_ref, noise_ref, out_ref = refs
    else:
        s_ref, w_ref, b_ref, embt_ref, out_ref = refs
        noise_ref = None

    inv_t = jnp.float32(inv_temperature)
    d = embt_ref.shape[0]        # encoding_dim D
    a = embt_ref.shape[1]        # number of actions A (embedding rows minus 1)

    s = s_ref[...].astype(jnp.float32)                                   # (bb, D+1)

    # Fused projection: [embedding | end] = s @ [W_map^T | W_end^T] + [b_map | b_end]
    proj = jnp.dot(s, w_ref[...], preferred_element_type=jnp.float32)    # (bb, D+2)
    proj = proj + b_ref[...]
    emb = proj[:, :d]                                                    # (bb, D)
    e0 = proj[:, d:d + 1]                                                # (bb, 1)
    e1 = proj[:, d + 1:d + 2]                                            # (bb, 1)

    # softmax over the 2 "end" logits == sigmoid of the scaled difference.
    p_end = 1.0 / (1.0 + jnp.exp((e0 - e1) * inv_t))                     # (bb, 1)
    p_cont = 1.0 - p_end                                                 # (bb, 1)

    # Action logits, max-subtracted (so max(exp) == 1 exactly).
    logits = jnp.dot(emb, embt_ref[...], preferred_element_type=jnp.float32) * inv_t
    logits = logits - jnp.max(logits, axis=-1, keepdims=True)            # (bb, A)
    pe = jnp.exp(logits)                                                 # (bb, A)
    sum_pe = jnp.sum(pe, axis=-1, keepdims=True)                         # (bb, 1)

    # Unnormalized weights of the virtual concat [action_probs*p_cont, p_end],
    # scaled by the positive factor sum_pe (argmax / Categorical invariant):
    #   w_i = exp(logit_i - max) * p_cont   (i < A)
    #   w_A = p_end * sum_pe
    w_a = pe * p_cont                                                    # (bb, A)
    w_e = p_end * sum_pe                                                 # (bb, 1)

    if is_training:
        # Exponential race (== Gumbel-max): argmax(w / E), E ~ iid Exp(1).
        inv_e = pl.reciprocal(noise_ref[...].astype(jnp.float32), approx=True)  # (bb, A+1)
        score_a = w_a * inv_e[:, :a]
        score_e = w_e * inv_e[:, a:a + 1]
    else:
        score_a = w_a
        score_e = w_e

    # argmax over the virtual concat with torch.max first-index tie-breaking.
    col = jax.lax.broadcasted_iota(jnp.int32, score_a.shape, 1)          # (bb, A)
    max_a = jnp.max(score_a, axis=-1, keepdims=True)                     # (bb, 1)
    first_idx = jnp.min(jnp.where(score_a >= max_a, col, jnp.int32(a)),
                        axis=-1, keepdims=True)                          # (bb, 1)
    action = jnp.where(score_e > max_a, jnp.int32(a), first_idx)         # (bb, 1)

    out_ref[...] = action.astype(jnp.int32)


def prepare_actor_params(params):
    """One-time parameter prep (hoisted out of the hot path)."""
    w_fused = jnp.concatenate([params["map_w"].T, params["end_w"].T], axis=1)   # (D+1, D+2)
    b_fused = jnp.concatenate([params["map_b"], params["end_b"]])[None, :]      # (1, D+2)
    emb_t = params["emb_table"].T                                               # (D, A)
    return {"w_fused": w_fused, "b_fused": b_fused, "emb_t": emb_t}


@functools.partial(jax.jit, static_argnames=("is_training", "temperature", "block_b"))
def actor_forward(prepared, s, is_training, key=None, *, temperature=1.0, block_b=256):
    """Run Actor.forward. Returns int32 actions of shape (B,)."""
    w = prepared["w_fused"]
    b = prepared["b_fused"]
    embt = prepared["emb_t"]

    B = s.shape[0]
    D1, D2 = w.shape                 # (D+1, D+2)
    A = embt.shape[1]
    bb = min(B, block_b)
    grid = (pl.cdiv(B, bb),)

    in_specs = [
        pl.BlockSpec((bb, D1), lambda i: (i, 0)),     # s           (batch-tiled)
        pl.BlockSpec((D1, D2), lambda i: (0, 0)),     # fused W     (resident)
        pl.BlockSpec((1, D2), lambda i: (0, 0)),      # fused bias  (resident)
        pl.BlockSpec(embt.shape, lambda i: (0, 0)),   # E^T         (resident)
    ]
    inputs = [s, w, b, embt]

    if is_training:
        if key is None:
            raise ValueError("training mode requires a PRNG key")
        # Exponential(1) noise generated on-device by XLA (the in-kernel TPU PRNG
        # has no CPU/interpret lowering); consumed in-kernel via exponential race.
        noise = jax.random.exponential(key, (B, A + 1), jnp.float32)
        in_specs.append(pl.BlockSpec((bb, A + 1), lambda i: (i, 0)))
        inputs.append(noise)

    kern = functools.partial(_actor_kernel, is_training=is_training,
                             inv_temperature=1.0 / temperature)

    out = pl.pallas_call(
        kern,
        grid=grid,
        out_shape=jax.ShapeDtypeStruct((B, 1), jnp.int32),
        in_specs=in_specs,
        out_specs=pl.BlockSpec((bb, 1), lambda i: (i, 0)),
        compiler_params=pltpu.CompilerParams(dimension_semantics=("parallel",)),
    )(*inputs)
    # TODO(synk): at very large B, emit a lane-dense (1, B) output instead of (B, 1).
    return out[:, 0]


def actor_forward_ref(params, s, temperature=1.0):
    """Pure-JAX reference of the eval (argmax) path."""
    emb = s @ params["map_w"].T + params["map_b"]
    end = s @ params["end_w"].T + params["end_b"]
    end_probs = jax.nn.softmax(end / temperature, axis=-1)
    action_probs = jax.nn.softmax(emb @ params["emb_table"].T / temperature, axis=-1)
    probs = jnp.concatenate(
        [action_probs * end_probs[:, 0:1], end_probs[:, 1:2]], axis=-1)
    return jnp.argmax(probs, axis=-1).astype(jnp.int32)


if __name__ == "__main__":
    key = jax.random.PRNGKey(0)
    state_dim = 32          # encoding_dim D
    num_embeddings = 17     # embedding_table rows; actor uses [:-1] -> A = 16
    batch = 8

    ks = jax.random.split(key, 7)
    # nn.Linear(D+1, D) / nn.Linear(D+1, 2) weights (out, in) + biases, plus table.
    params = {
        "map_w": jax.random.normal(ks[0], (state_dim, state_dim + 1), jnp.float32) * 0.1,
        "map_b": jax.random.normal(ks[1], (state_dim,), jnp.float32) * 0.1,
        "end_w": jax.random.normal(ks[2], (2, state_dim + 1), jnp.float32) * 0.1,
        "end_b": jax.random.normal(ks[3], (2,), jnp.float32) * 0.1,
        "emb_table": jax.random.normal(
            ks[4], (num_embeddings, state_dim), jnp.float32)[:-1],  # (A, D)
    }
    s = jax.random.normal(ks[5], (batch, state_dim + 1), jnp.float32)

    prepared = prepare_actor_params(params)

    # Eval path (is_training=False): deterministic argmax, check vs reference.
    act_eval = jax.block_until_ready(actor_forward(prepared, s, is_training=False))
    ref = actor_forward_ref(params, s)
    assert act_eval.shape == (batch,)
    assert bool(jnp.all(act_eval == ref)), (act_eval, ref)

    # Training path (is_training=True): Categorical sample via exponential race.
    act_train = jax.block_until_ready(
        actor_forward(prepared, s, is_training=True, key=ks[6]))
    assert act_train.shape == (batch,)
    assert bool(jnp.all((act_train >= 0) & (act_train <= num_embeddings - 1)))

    print("KERNEL_OK")
</pallas_src>

<mosaic_0001>
module attributes {stable_mosaic.version = 11 : i64} {
  func.func @_actor_kernel(%arg0: i32, %arg1: memref<8x33xf32, #tpu.memory_space<vmem>>, %arg2: memref<33x34xf32, #tpu.memory_space<vmem>>, %arg3: memref<1x34xf32, #tpu.memory_space<vmem>>, %arg4: memref<32x16xf32, #tpu.memory_space<vmem>>, %arg5: memref<8x1xi32, #tpu.memory_space<vmem>>) attributes {dimension_semantics = [#tpu.dimension_semantics<parallel>], iteration_bounds = array<i64: 1>, scalar_prefetch = 0 : i64, scratch_operands = 0 : i64, tpu.core_type = #tpu.core_type<tc>, window_params = [{transform_indices = @transform_0, window_bounds = array<i64: 8, 33>}, {pipeline_mode = #tpu.pipeline_mode<synchronous>, transform_indices = @transform_1, window_bounds = array<i64: 33, 34>}, {pipeline_mode = #tpu.pipeline_mode<synchronous>, transform_indices = @transform_2, window_bounds = array<i64: 1, 34>}, {pipeline_mode = #tpu.pipeline_mode<synchronous>, transform_indices = @transform_3, window_bounds = array<i64: 32, 16>}, {transform_indices = @transform_4, window_bounds = array<i64: 8, 1>}]} {
    %c0 = arith.constant 0 : index
    %c0_0 = arith.constant 0 : index
    %0 = vector.load %arg1[%c0, %c0_0] : memref<8x33xf32, #tpu.memory_space<vmem>>, vector<8x33xf32>
    %c0_1 = arith.constant 0 : index
    %c0_2 = arith.constant 0 : index
    %1 = vector.load %arg2[%c0_1, %c0_2] : memref<33x34xf32, #tpu.memory_space<vmem>>, vector<33x34xf32>
    %cst = arith.constant dense<0.000000e+00> : vector<8x34xf32>
    %2 = tpu.matmul %0, %1, %cst {dimension_numbers = #tpu.dot_dimension_numbers<[1], [0], [0], [1], [0, 0, 1, 1], [], []>} : vector<8x33xf32>, vector<33x34xf32>, vector<8x34xf32> -> vector<8x34xf32>
    %c0_3 = arith.constant 0 : index
    %c0_4 = arith.constant 0 : index
    %3 = vector.load %arg3[%c0_3, %c0_4] : memref<1x34xf32, #tpu.memory_space<vmem>>, vector<1x34xf32>
    %4 = vector.broadcast %3 : vector<1x34xf32> to vector<8x34xf32>
    %5 = arith.addf %2, %4 : vector<8x34xf32>
    %6 = vector.extract_strided_slice %5 {offsets = [0, 0], sizes = [8, 32], strides = [1, 1]} : vector<8x34xf32> to vector<8x32xf32>
    %7 = vector.extract_strided_slice %5 {offsets = [0, 32], sizes = [8, 1], strides = [1, 1]} : vector<8x34xf32> to vector<8x1xf32>
    %8 = vector.extract_strided_slice %5 {offsets = [0, 33], sizes = [8, 1], strides = [1, 1]} : vector<8x34xf32> to vector<8x1xf32>
    %9 = arith.subf %7, %8 : vector<8x1xf32>
    %cst_5 = arith.constant 1.000000e+00 : f32
    %10 = vector.broadcast %cst_5 : f32 to vector<8x1xf32>
    %11 = arith.mulf %9, %10 : vector<8x1xf32>
    %12 = math.exp %11 : vector<8x1xf32>
    %cst_6 = arith.constant 1.000000e+00 : f32
    %13 = vector.broadcast %cst_6 : f32 to vector<8x1xf32>
    %14 = arith.addf %13, %12 : vector<8x1xf32>
    %cst_7 = arith.constant 1.000000e+00 : f32
    %15 = vector.broadcast %cst_7 : f32 to vector<8x1xf32>
    %16 = arith.divf %15, %14 : vector<8x1xf32>
    %cst_8 = arith.constant 1.000000e+00 : f32
    %17 = vector.broadcast %cst_8 : f32 to vector<8x1xf32>
    %18 = arith.subf %17, %16 : vector<8x1xf32>
    %c0_9 = arith.constant 0 : index
    %c0_10 = arith.constant 0 : index
    %19 = vector.load %arg4[%c0_9, %c0_10] : memref<32x16xf32, #tpu.memory_space<vmem>>, vector<32x16xf32>
    %cst_11 = arith.constant dense<0.000000e+00> : vector<8x16xf32>
    %20 = tpu.matmul %6, %19, %cst_11 {dimension_numbers = #tpu.dot_dimension_numbers<[1], [0], [0], [1], [0, 0, 1, 1], [], []>} : vector<8x32xf32>, vector<32x16xf32>, vector<8x16xf32> -> vector<8x16xf32>
    %cst_12 = arith.constant 1.000000e+00 : f32
    %21 = vector.broadcast %cst_12 : f32 to vector<8x16xf32>
    %22 = arith.mulf %20, %21 : vector<8x16xf32>
    %cst_13 = arith.constant dense<0xFF800000> : vector<8xf32>
    %23 = vector.multi_reduction <maximumf>, %22, %cst_13 [1] : vector<8x16xf32> to vector<8xf32>
    %24 = vector.shape_cast %23 : vector<8xf32> to vector<8x1xf32>
    %25 = vector.broadcast %24 : vector<8x1xf32> to vector<8x16xf32>
    %26 = arith.subf %22, %25 : vector<8x16xf32>
    %27 = math.exp %26 : vector<8x16xf32>
    %cst_14 = arith.constant dense<0.000000e+00> : vector<8xf32>
    %28 = vector.multi_reduction <add>, %27, %cst_14 [1] : vector<8x16xf32> to vector<8xf32>
    %29 = vector.shape_cast %28 : vector<8xf32> to vector<8x1xf32>
    %30 = vector.broadcast %18 : vector<8x1xf32> to vector<8x16xf32>
    %31 = arith.mulf %27, %30 : vector<8x16xf32>
    %32 = arith.mulf %16, %29 : vector<8x1xf32>
    %33 = tpu.iota {dimensions = array<i32: 1>} : vector<8x16xi32>
    %cst_15 = arith.constant dense<0xFF800000> : vector<8xf32>
    %34 = vector.multi_reduction <maximumf>, %31, %cst_15 [1] : vector<8x16xf32> to vector<8xf32>
    %35 = vector.shape_cast %34 : vector<8xf32> to vector<8x1xf32>
    %36 = vector.broadcast %35 : vector<8x1xf32> to vector<8x16xf32>
    %37 = arith.cmpf oge, %31, %36 : vector<8x16xf32>
    %c16_i32 = arith.constant 16 : i32
    %38 = vector.broadcast %c16_i32 : i32 to vector<8x16xi32>
    %39 = arith.select %37, %33, %38 : vector<8x16xi1>, vector<8x16xi32>
    %cst_16 = arith.constant dense<2147483647> : vector<8xi32>
    %40 = vector.multi_reduction <minsi>, %39, %cst_16 [1] : vector<8x16xi32> to vector<8xi32>
    %41 = vector.shape_cast %40 : vector<8xi32> to vector<8x1xi32>
    %42 = arith.cmpf ogt, %32, %35 : vector<8x1xf32>
    %c16_i32_17 = arith.constant 16 : i32
    %43 = vector.broadcast %c16_i32_17 : i32 to vector<8x1xi32>
    %44 = arith.select %42, %43, %41 : vector<8x1xi1>, vector<8x1xi32>
    %c0_18 = arith.constant 0 : index
    %c0_19 = arith.constant 0 : index
    %45 = vector.load %arg5[%c0_18, %c0_19] : memref<8x1xi32, #tpu.memory_space<vmem>>, vector<8x1xi32>
    tpu.vector_store %arg5[%c0_18, %c0_19], %44 {strides = array<i32>} : memref<8x1xi32, #tpu.memory_space<vmem>>, vector<8x1xi32>,
    return
  }
  func.func @transform_0(%arg0: i32) -> (i32, i32) {
    %c0_i32 = arith.constant 0 : i32
    %c0_i32_0 = arith.constant 0 : i32
    return %arg0, %c0_i32 : i32, i32
  }
  func.func @transform_1(%arg0: i32) -> (i32, i32) {
    %c0_i32 = arith.constant 0 : i32
    %c0_i32_0 = arith.constant 0 : i32
    %c0_i32_1 = arith.constant 0 : i32
    return %c0_i32, %c0_i32_0 : i32, i32
  }
  func.func @transform_2(%arg0: i32) -> (i32, i32) {
    %c0_i32 = arith.constant 0 : i32
    %c0_i32_0 = arith.constant 0 : i32
    %c0_i32_1 = arith.constant 0 : i32
    return %c0_i32, %c0_i32_0 : i32, i32
  }
  func.func @transform_3(%arg0: i32) -> (i32, i32) {
    %c0_i32 = arith.constant 0 : i32
    %c0_i32_0 = arith.constant 0 : i32
    %c0_i32_1 = arith.constant 0 : i32
    return %c0_i32, %c0_i32_0 : i32, i32
  }
  func.func @transform_4(%arg0: i32) -> (i32, i32) {
    %c0_i32 = arith.constant 0 : i32
    %c0_i32_0 = arith.constant 0 : i32
    return %arg0, %c0_i32 : i32, i32
  }
}

</mosaic_0001>

<llo_original>
// kernel: actor_forward.1
$region0: #{actor_forward.1}
  #allocation0 [shape = 'u32[]', space=smem, size = 0x4, offset = 0x4, fixed_abs, tag = 'smem constant byte address 0x4 - core index']
  #allocation1 [shape = 'u32[144,128]{1,0:T(1,128)}', space=vmem, size = 0x12000, scoped, tag = 'internal scratch']
  %s0 = inlined_call_operand.vmem [shape: f32[8,33], index: 0, kind: input, shape index: {}]
  %s1 = inlined_call_operand.vmem [shape: f32[33,34], index: 1, kind: input, shape index: {}]
  %s2 = inlined_call_operand.vmem [shape: f32[1,34], index: 2, kind: input, shape index: {}]
  %s3 = inlined_call_operand.vmem [shape: f32[32,16], index: 3, kind: input, shape index: {}]
  %s4 = inlined_call_operand.vmem [shape: s32[8,1], index: 4, kind: output, shape index: {}]
  %s5 = sld [smem:[#allocation0]]
  $region26: #{actor_forward.1} parent=0
    _
  %s7 = ssub.s32 1, %s5
  %s8 = scalar_select 0, %s7, %s5
  // Predicated region
  $region2: #{actor_forward.1} parent=0 // pred_check
    _
  $region3: #{actor_forward.1} parent=0 // pred_check_branch
    %10 = sbr.rel (0) target = $region5
  $region4: #{actor_forward.1} parent=0 // pred_region
    _
  $region5: #{actor_forward.1} parent=0 // pred_fallthru
    _
  // Predicated region
  $region6: #{actor_forward.1} parent=0 // pred_check
    _
  $region7: #{actor_forward.1} parent=0 // pred_check_branch
    %12 = sbr.rel (0) target = $region9
  $region8: #{actor_forward.1} parent=0 // pred_region
    _
  $region9: #{actor_forward.1} parent=0 // pred_fallthru
    _
  // Predicated region
  $region10: #{actor_forward.1} parent=0 // pred_check
    _
  $region11: #{actor_forward.1} parent=0 // pred_check_branch
    %14 = sbr.rel (0) target = $region13
  $region12: #{actor_forward.1} parent=0 // pred_region
    _
  $region13: #{actor_forward.1} parent=0 // pred_fallthru
    _
  // Predicated region
  $region14: #{actor_forward.1} parent=0 // pred_check
    _
  $region15: #{actor_forward.1} parent=0 // pred_check_branch
    %16 = sbr.rel (0) target = $region17
  $region16: #{actor_forward.1} parent=0 // pred_region
    _
  $region17: #{actor_forward.1} parent=0 // pred_fallthru
    _
  %v17 = vld [vmem:[%s0] sm:$0xff]
  %v18 = vld [vmem:[%s1] sm:$0xff]
  %v19 = vld [vmem:[%s1 + $0x8] sm:$0xff]
  %v20 = vld [vmem:[%s1 + $0x10] sm:$0xff]
  %v21 = vld [vmem:[%s1 + $0x18] sm:$0xff]
  %v22 = vld [vmem:[%s1 + $0x20] sm:$0x1]
  %v23 = vld [vmem:[%s2] sm:$0x1]
  %v25 = vlaneseq
  %v26 = vshrl.u32 %v25, 7
  %v27 = vsub.s32 0, %v26
  %v28 = vrot.slane %v23, %v27
  %vm30 = vcmask 269312
  %v32 = vsel %vm30, %v17, 0
  %vm34 = vcmask 1040384
  %v36 = vsel %vm34, %v22, 0
  %38 = vmatprep.subr.mxu0 0.0
  %39 = vmatpush1.msra.mxu0 %v18
  %40 = vmatprep.subr.mxu0 0.0
  %41 = vmatpush1.msra.mxu0 %v19
  %42 = vmatprep.subr.mxu0 0.0
  %43 = vmatpush1.msra.mxu0 %v20
  %44 = vmatprep.subr.mxu0 0.0
  %45 = vmatpush1.msra.mxu0 %v21
  %46 = vmatprep.subr.mxu0 0.0
  %47 = vmatpush1.msra.mxu0 %v36
  %48 = vmatprep.subr.mxu0 0.0
  %49 = vmatpush1.msra.mxu0 0.0
  %50 = vmatprep.subr.mxu0 0.0
  %51 = vmatpush1.msra.mxu0 0.0
  %52 = vmatprep.subr.mxu0 0.0
  %53 = vmatpush1.msra.mxu0 0.0
  %54 = vmatprep.subr.mxu0 0.0
  %55 = vmatpush1.msra.mxu0 0.0
  %56 = vmatprep.subr.mxu0 0.0
  %57 = vmatpush1.msra.mxu0 0.0
  %58 = vmatprep.subr.mxu0 0.0
  %59 = vmatpush1.msra.mxu0 0.0
  %60 = vmatprep.subr.mxu0 0.0
  %61 = vmatpush1.msra.mxu0 0.0
  %62 = vmatprep.subr.mxu0 0.0
  %63 = vmatpush1.msra.mxu0 0.0
  %64 = vmatprep.subr.mxu0 0.0
  %65 = vmatpush1.msra.mxu0 0.0
  %66 = vmatprep.subr.mxu0 0.0
  %67 = vmatpush1.msra.mxu0 0.0
  %68 = vmatprep.subr.mxu0 0.0
  %69 = vmatpush1.msra.mxu0 0.0
  %70 = vmatprep.subr.mxu0 0.0
  %71 = vmatpush1.msra.mxu0 0.0
  %72 = vmatprep.subr.mxu0 0.0
  %73 = vmatpush1.msra.mxu0 0.0
  %74 = vmatprep.subr.mxu0 0.0
  %75 = vmatpush1.msra.mxu0 0.0
  %76 = vmatprep.subr.mxu0 0.0
  %77 = vmatpush1.msra.mxu0 0.0
  %78 = vmatprep.subr.mxu0 0.0
  %79 = vmatpush1.msra.mxu0 0.0
  %80 = vmatprep.subr.mxu0 0.0
  %81 = vmatpush1.msra.mxu0 0.0
  %82 = vmatprep.subr.mxu0 0.0
  %83 = vmatpush1.msra.mxu0 0.0
  %84 = vmatprep.subr.mxu0 0.0
  %85 = vmatpush1.msra.mxu0 0.0
  %86 = vmatprep.subr.mxu0 0.0
  %87 = vmatpush1.msra.mxu0 0.0
  %88 = vmatprep.subr.mxu0 0.0
  %89 = vmatpush1.msra.mxu0 0.0
  %90 = vmatprep.subr.mxu0 0.0
  %91 = vmatpush1.msra.mxu0 0.0
  %92 = vmatprep.subr.mxu0 0.0
  %93 = vmatpush1.msra.mxu0 0.0
  %94 = vmatprep.subr.mxu0 0.0
  %95 = vmatpush1.msra.mxu0 0.0
  %96 = vmatprep.subr.mxu0 0.0
  %97 = vmatpush1.msra.mxu0 0.0
  %98 = vmatprep.subr.mxu0 0.0
  %99 = vmatpush1.msra.mxu0 0.0
  %100 = vmatprep.subr.mxu0 0.0
  %101 = vmatpush1.msra.mxu0 0.0
  %102 = vmatprep.mubr.f32.mxu0 0.0
  %103 = vmatmul.mubr.f32.gmra.mrb[0].mxu0 %v32
  %v104 = vpop.f32.mrb[0].mxu0
  %v105 = vadd.f32 %v28, %v104
  %v106 = vpop.f32.mrb[0].mxu0
  %107 = vdwg.mxu0
  %109 = vrot.lane.b32.xlu0 %v105, 127
  %v110 = vpop.permute.xlu0 %109
  %v112 = vsub.f32 %v105, %v110
  %v113 = vmul.f32 %v112, 1.442695
  %v114 = vpow.pop %v113
  %v115 = vadd.f32 %v114, 1.0
  %v116 = vrcp.pop %v115
  %v117 = vmul.f32 1.0, %v116
  %v118 = vsub.f32 1.0, %v117
  %v119 = vld [vmem:[%s3] sm:$0xff]
  %v120 = vld [vmem:[%s3 + $0x8] sm:$0xff]
  %v121 = vld [vmem:[%s3 + $0x10] sm:$0xff]
  %v122 = vld [vmem:[%s3 + $0x18] sm:$0xff]
  %vm123 = vcmask 261120
  %v124 = vsel %vm123, %v105, 0
  %126 = vmatprep.subr.mxu0 0.0
  %127 = vmatpush1.msra.mxu0 %v119
  %128 = vmatprep.subr.mxu0 0.0
  %129 = vmatpush1.msra.mxu0 %v120
  %130 = vmatprep.subr.mxu0 0.0
  %131 = vmatpush1.msra.mxu0 %v121
  %132 = vmatprep.subr.mxu0 0.0
  %133 = vmatpush1.msra.mxu0 %v122
  %134 = vmatprep.subr.mxu0 0.0
  %135 = vmatpush1.msra.mxu0 0.0
  %136 = vmatprep.subr.mxu0 0.0
  %137 = vmatpush1.msra.mxu0 0.0
  %138 = vmatprep.subr.mxu0 0.0
  %139 = vmatpush1.msra.mxu0 0.0
  %140 = vmatprep.subr.mxu0 0.0
  %141 = vmatpush1.msra.mxu0 0.0
  %142 = vmatprep.subr.mxu0 0.0
  %143 = vmatpush1.msra.mxu0 0.0
  %144 = vmatprep.subr.mxu0 0.0
  %145 = vmatpush1.msra.mxu0 0.0
  %146 = vmatprep.subr.mxu0 0.0
  %147 = vmatpush1.msra.mxu0 0.0
  %148 = vmatprep.subr.mxu0 0.0
  %149 = vmatpush1.msra.mxu0 0.0
  %150 = vmatprep.subr.mxu0 0.0
  %151 = vmatpush1.msra.mxu0 0.0
  %152 = vmatprep.subr.mxu0 0.0
  %153 = vmatpush1.msra.mxu0 0.0
  %154 = vmatprep.subr.mxu0 0.0
  %155 = vmatpush1.msra.mxu0 0.0
  %156 = vmatprep.subr.mxu0 0.0
  %157 = vmatpush1.msra.mxu0 0.0
  %158 = vmatprep.subr.mxu0 0.0
  %159 = vmatpush1.msra.mxu0 0.0
  %160 = vmatprep.subr.mxu0 0.0
  %161 = vmatpush1.msra.mxu0 0.0
  %162 = vmatprep.subr.mxu0 0.0
  %163 = vmatpush1.msra.mxu0 0.0
  %164 = vmatprep.subr.mxu0 0.0
  %165 = vmatpush1.msra.mxu0 0.0
  %166 = vmatprep.subr.mxu0 0.0
  %167 = vmatpush1.msra.mxu0 0.0
  %168 = vmatprep.subr.mxu0 0.0
  %169 = vmatpush1.msra.mxu0 0.0
  %170 = vmatprep.subr.mxu0 0.0
  %171 = vmatpush1.msra.mxu0 0.0
  %172 = vmatprep.subr.mxu0 0.0
  %173 = vmatpush1.msra.mxu0 0.0
  %174 = vmatprep.subr.mxu0 0.0
  %175 = vmatpush1.msra.mxu0 0.0
  %176 = vmatprep.subr.mxu0 0.0
  %177 = vmatpush1.msra.mxu0 0.0
  %178 = vmatprep.subr.mxu0 0.0
  %179 = vmatpush1.msra.mxu0 0.0
  %180 = vmatprep.subr.mxu0 0.0
  %181 = vmatpush1.msra.mxu0 0.0
  %182 = vmatprep.subr.mxu0 0.0
  %183 = vmatpush1.msra.mxu0 0.0
  %184 = vmatprep.subr.mxu0 0.0
  %185 = vmatpush1.msra.mxu0 0.0
  %186 = vmatprep.subr.mxu0 0.0
  %187 = vmatpush1.msra.mxu0 0.0
  %188 = vmatprep.subr.mxu0 0.0
  %189 = vmatpush1.msra.mxu0 0.0
  %190 = vmatprep.mubr.f32.mxu0 0.0
  %191 = vmatmul.mubr.f32.gmra.mrb[0].mxu0 %v124
  %v192 = vpop.f32.mrb[0].mxu0
  %v193 = vadd.f32 0.0, %v192
  %v194 = vpop.f32.mrb[0].mxu0
  %195 = vdwg.mxu0
  %vm196 = vcmask 130048
  %v197 = vsel %vm196, %v193, -inf
  %198 = vmax.xlane.f32.xlu0 %v197
  %v199 = vpop.xlane.xlu0 %198
  %v200 = vsub.f32 %v193, %v199
  %v201 = vmul.f32 %v200, 1.442695
  %v202 = vpow.pop %v201
  %v203 = vsel %vm196, %v202, 0.0
  %204 = vadd.xlane.f32.xlu0 %v203
  %v205 = vpop.xlane.xlu0 %204
  %207 = vset.pattern.permute.xlu0 32
  %208 = vperm.xlu0 %207, %v118
  %v209 = vpop.permute.xlu0 %208
  %v211 = vmul.f32 %v202, %v209
  %v212 = vmul.f32 %v117, %v205
  %v213 = vlaneseq
  %v214 = vand.u32 %v213, 127
  %v215 = vsel %vm196, %v211, -inf
  %216 = vmax.xlane.f32.xlu0 %v215
  %v217 = vpop.xlane.xlu0 %216
  %vm218 = vcmp.ge.f32.partialorder %v211, %v217
  %v219 = vsel %vm218, %v214, 16
  %v220 = vsel %vm196, %v219, 2147483647
  %v221 = vand.u32 %v220, 65535
  %v222 = vshra.s32 %v220, 16
  %v223 = vcvt.s32.f32 %v221
  %v224 = vcvt.s32.f32 %v222
  %225 = vmin.xlane.f32.xlu0 %v224
  %v226 = vpop.xlane.xlu0 %225
  %vm227 = vcmp.eq.f32.partialorder %v224, %v226
  %v228 = vsel %vm227, %v223, inf
  %229 = vmin.xlane.f32.xlu0 %v228
  %v230 = vpop.xlane.xlu0 %229
  %v231 = vcvt.f32.s32 %v230
  %v232 = vcvt.f32.s32 %v226
  %v233 = vshll.u32 %v232, 16
  %v234 = vadd.s32 %v233, %v231
  %vm235 = vcmp.gt.f32.partialorder %v212, %v217
  %v236 = vsel %vm235, 16, %v234
  %237 = vrot.lane.b32.xlu0 %v236, 96
  %v238 = vpop.permute.xlu0 %237
  %vm239 = vcmask 7168
  %240 = vst.msk [vmem:[%s4] sm:$0xff] %vm239, %v238
  // Predicated region
  $region18: #{actor_forward.1} parent=0 // pred_check
    _
  $region19: #{actor_forward.1} parent=0 // pred_check_branch
    %242 = sbr.rel (0) target = $region21
  $region20: #{actor_forward.1} parent=0 // pred_region
    _
  $region21: #{actor_forward.1} parent=0 // pred_fallthru
    _
  // Predicated region
  $region22: #{actor_forward.1} parent=0 // pred_check
    _
  $region23: #{actor_forward.1} parent=0 // pred_check_branch
    %244 = sbr.rel (0) target = $region25
  $region24: #{actor_forward.1} parent=0 // pred_region
    _
  $region25: #{actor_forward.1} parent=0 // pred_fallthru
    _

</llo_original>
